<compile_context>
chip_gen: v6e
topology: v6e:2x2x1
jax: 0.10.0
libtpu: 0.0.40
codegen_flags: <defaults>
</compile_context>

<pallas_src>
import functools

import jax
import jax.numpy as jnp
from jax.experimental import pallas as pl
from jax.experimental.pallas import tpu as pltpu


def qatt_kernel(x_ref, w1_ref, b1_ref, w2_ref, b2_ref, out_ref, *, t_real):
    # x_ref  : (Bn, T_pad, D)  bf16 batch tile (tokens padded to T_pad)
    # w1_ref : (D, H) bf16, b1_ref: (1, H) f32
    # w2_ref : (H, G) bf16, b2_ref: (1, G) f32
    # out_ref: (Bn, G*D) f32   lane-contiguous glimpse concat
    Bn, T_pad, D = x_ref.shape
    G = w2_ref.shape[1]

    x = x_ref[...]                                   # (Bn, T_pad, D) bf16

    # --- MLP: bf16 operands on the MXU, f32 accumulation ---------------------
    # T_pad is a multiple of 16, so this leading-dim merge is layout-preserving.
    x2 = x.reshape(Bn * T_pad, D)                    # (Bn*T_pad, D) bf16
    h = jnp.dot(x2, w1_ref[...], preferred_element_type=jnp.float32) + b1_ref[...]
    h = jnp.maximum(h, 0.0)                          # (Bn*T_pad, H) f32
    logits = jnp.dot(h.astype(jnp.bfloat16), w2_ref[...],
                     preferred_element_type=jnp.float32) + b2_ref[...]
    logits = logits.reshape(Bn, T_pad, G)            # (Bn, T_pad, G) f32

    # --- mask padded tokens, then softmax over the token axis (dim=1) --------
    if t_real != T_pad:                              # static Python check
        t_ids = jax.lax.broadcasted_iota(jnp.int32, (Bn, T_pad, G), 1)
        logits = jnp.where(t_ids < t_real, logits, -1e30)

    m = jnp.max(logits, axis=1, keepdims=True)
    e = jnp.exp(logits - m)
    att = e * pl.reciprocal(jnp.sum(e, axis=1, keepdims=True), approx=True)  # (Bn, T_pad, G)

    # --- attention-weighted token sums (VPU), single lane-dense store --------
    # feat_g[b, d] = sum_t att[b, t, g] * x[b, t, d]; G is tiny (=2), so a VPU
    # broadcast-multiply + sublane reduction beats a 2-wide MXU pass.  Both
    # glimpses read the same `x` value; products/accumulation are f32.
    feats = [jnp.sum(att[:, :, g:g + 1] * x, axis=1) for g in range(G)]  # each (Bn, D) f32
    out_ref[...] = jnp.concatenate(feats, axis=-1).astype(out_ref.dtype)


def qatt_forward(ques_feat, w1, b1, w2, b2, block_n=128):
    """ques_feat: (N, T, D) float32 -> (N, D*G) float32"""
    N, T, D = ques_feat.shape
    H = w1.shape[1]
    G = w2.shape[1]

    # --- sublane-align T (multiple of 16 for bf16 packing); mask in-kernel ---
    T_pad = ((T + 15) // 16) * 16
    if T_pad != T:
        ques_feat = jnp.pad(ques_feat, ((0, 0), (0, T_pad - T), (0, 0)))

    # --- batch tiling ---------------------------------------------------------
    # block_n=128 keeps the per-step working set ~12 MB (bf16 input) at
    # production MFB sizes (T=16, D=1024, H=512, G=2): safe on v7x (64 MiB/TC)
    # and within the explicit 64 MiB budget everywhere.  (v6e could sweep 256.)
    Bn = min(block_n, N)
    # v7x megacore: if the whole batch fits a single tile but is big enough,
    # split into >= 2 sublane-aligned tiles so both TensorCores get work.
    if N >= 16 and pl.cdiv(N, Bn) < 2:
        Bn = ((pl.cdiv(N, 2)) + 7) // 8 * 8
    n_tiles = pl.cdiv(N, Bn)
    N_pad = n_tiles * Bn
    if N_pad != N:
        # Zero-pad the batch so every grid step sees a full tile; padded rows
        # produce finite garbage that is sliced away below.
        ques_feat = jnp.pad(ques_feat, ((0, N_pad - N), (0, 0), (0, 0)))

    # --- bf16 at the HBM boundary (inputs + MXU operands), f32 accumulation ---
    x_bf16 = ques_feat.astype(jnp.bfloat16)
    w1_bf16 = w1.astype(jnp.bfloat16)
    w2_bf16 = w2.astype(jnp.bfloat16)
    b1_2d = b1.reshape(1, H).astype(jnp.float32)
    b2_2d = b2.reshape(1, G).astype(jnp.float32)

    kernel = functools.partial(qatt_kernel, t_real=T)

    out = pl.pallas_call(
        kernel,
        out_shape=jax.ShapeDtypeStruct((N_pad, G * D), jnp.float32),
        grid_spec=pltpu.PrefetchScalarGridSpec(
            num_scalar_prefetch=0,
            grid=(n_tiles,),
            in_specs=[
                pl.BlockSpec((Bn, T_pad, D), lambda n: (n, 0, 0)),   # batch tile of ques_feat
                pl.BlockSpec((D, H), lambda n: (0, 0)),              # W1 (pinned in VMEM)
                pl.BlockSpec((1, H), lambda n: (0, 0)),              # b1
                pl.BlockSpec((H, G), lambda n: (0, 0)),              # W2
                pl.BlockSpec((1, G), lambda n: (0, 0)),              # b2
            ],
            out_specs=pl.BlockSpec((Bn, G * D), lambda n: (n, 0)),
        ),
        compiler_params=pltpu.CompilerParams(
            # Batch tiles are independent -> megacore split on v7x.
            dimension_semantics=("parallel",),
            # Explicit budget: > actual working set, > v5e's 16 MiB default,
            # <= physical VMEM on every generation (64 MiB/TC on v7x).
            vmem_limit_bytes=64 * 1024 * 1024,
        ),
    )(x_bf16, w1_bf16, b1_2d, w2_bf16, b2_2d)

    return out[:N]  # (N, G*D), already in torch.cat(glimpse) order


def qatt_reference(ques_feat, w1, b1, w2, b2):
    """Pure-JAX f32 reference mirroring the PyTorch forward."""
    h = jnp.maximum(jnp.einsum("ntd,dh->nth", ques_feat, w1) + b1, 0.0)
    logits = jnp.einsum("nth,hg->ntg", h, w2) + b2
    maps = jax.nn.softmax(logits, axis=1)                     # softmax over T
    feat = jnp.einsum("ntg,ntd->ngd", maps, ques_feat)        # (N, G, D)
    return feat.reshape(ques_feat.shape[0], -1)


if __name__ == "__main__":
    # Small shapes consistent with the module:
    #   N (batch) = 2, T (tokens) = 8, LSTM_OUT_SIZE = 32, HIDDEN_SIZE = 32, Q_GLIMPSES = 2
    N, T, D, H, G = 2, 8, 32, 32, 2

    key = jax.random.PRNGKey(0)
    k_x, k_w1, k_b1, k_w2, k_b2 = jax.random.split(key, 5)

    ques_feat = jax.random.normal(k_x, (N, T, D), dtype=jnp.float32)
    w1 = jax.random.normal(k_w1, (D, H), dtype=jnp.float32) * 0.05
    b1 = jax.random.normal(k_b1, (H,), dtype=jnp.float32) * 0.05
    w2 = jax.random.normal(k_w2, (H, G), dtype=jnp.float32) * 0.05
    b2 = jax.random.normal(k_b2, (G,), dtype=jnp.float32) * 0.05

    out = qatt_forward(ques_feat, w1, b1, w2, b2)
    jax.block_until_ready(out)

    ref = qatt_reference(ques_feat, w1, b1, w2, b2)
    assert out.shape == (N, D * G), out.shape
    # bf16 MXU operands + bf16 input at the boundary + approx reciprocal:
    # compare against the f32 reference with a correspondingly loose tolerance.
    assert jnp.allclose(out, ref, atol=3e-2, rtol=3e-2), "mismatch vs reference"

    print("KERNEL_OK")
</pallas_src>

<mosaic_0001>
module attributes {stable_mosaic.version = 11 : i64} {
  func.func @qatt_kernel(%arg0: i32, %arg1: memref<2x16x32xbf16, #tpu.memory_space<vmem>>, %arg2: memref<32x32xbf16, #tpu.memory_space<vmem>>, %arg3: memref<1x32xf32, #tpu.memory_space<vmem>>, %arg4: memref<32x2xbf16, #tpu.memory_space<vmem>>, %arg5: memref<1x2xf32, #tpu.memory_space<vmem>>, %arg6: memref<2x64xf32, #tpu.memory_space<vmem>>) attributes {dimension_semantics = [#tpu.dimension_semantics<parallel>], iteration_bounds = array<i64: 1>, scalar_prefetch = 0 : i64, scratch_operands = 0 : i64, tpu.core_type = #tpu.core_type<tc>, window_params = [{transform_indices = @transform_0, window_bounds = array<i64: 2, 16, 32>}, {pipeline_mode = #tpu.pipeline_mode<synchronous>, transform_indices = @transform_1, window_bounds = array<i64: 32, 32>}, {pipeline_mode = #tpu.pipeline_mode<synchronous>, transform_indices = @transform_2, window_bounds = array<i64: 1, 32>}, {pipeline_mode = #tpu.pipeline_mode<synchronous>, transform_indices = @transform_3, window_bounds = array<i64: 32, 2>}, {pipeline_mode = #tpu.pipeline_mode<synchronous>, transform_indices = @transform_4, window_bounds = array<i64: 1, 2>}, {transform_indices = @transform_5, window_bounds = array<i64: 2, 64>}]} {
    %c0 = arith.constant 0 : index
    %c0_0 = arith.constant 0 : index
    %c0_1 = arith.constant 0 : index
    %0 = vector.load %arg1[%c0, %c0_0, %c0_1] : memref<2x16x32xbf16, #tpu.memory_space<vmem>>, vector<2x16x32xbf16>
    %1 = vector.shape_cast %0 : vector<2x16x32xbf16> to vector<32x32xbf16>
    %c0_2 = arith.constant 0 : index
    %c0_3 = arith.constant 0 : index
    %2 = vector.load %arg2[%c0_2, %c0_3] : memref<32x32xbf16, #tpu.memory_space<vmem>>, vector<32x32xbf16>
    %cst = arith.constant dense<0.000000e+00> : vector<32x32xf32>
    %3 = tpu.matmul %1, %2, %cst {dimension_numbers = #tpu.dot_dimension_numbers<[1], [0], [0], [1], [0, 0, 1, 1], [], []>} : vector<32x32xbf16>, vector<32x32xbf16>, vector<32x32xf32> -> vector<32x32xf32>
    %c0_4 = arith.constant 0 : index
    %c0_5 = arith.constant 0 : index
    %4 = vector.load %arg3[%c0_4, %c0_5] : memref<1x32xf32, #tpu.memory_space<vmem>>, vector<1x32xf32>
    %5 = vector.broadcast %4 : vector<1x32xf32> to vector<32x32xf32>
    %6 = arith.addf %3, %5 : vector<32x32xf32>
    %cst_6 = arith.constant 0.000000e+00 : f32
    %7 = vector.broadcast %cst_6 : f32 to vector<32x32xf32>
    %8 = arith.maximumf %6, %7 : vector<32x32xf32>
    %9 = arith.truncf %8 : vector<32x32xf32> to vector<32x32xbf16>
    %c0_7 = arith.constant 0 : index
    %c0_8 = arith.constant 0 : index
    %10 = vector.load %arg4[%c0_7, %c0_8] : memref<32x2xbf16, #tpu.memory_space<vmem>>, vector<32x2xbf16>
    %cst_9 = arith.constant dense<0.000000e+00> : vector<32x2xf32>
    %11 = tpu.matmul %9, %10, %cst_9 {dimension_numbers = #tpu.dot_dimension_numbers<[1], [0], [0], [1], [0, 0, 1, 1], [], []>} : vector<32x32xbf16>, vector<32x2xbf16>, vector<32x2xf32> -> vector<32x2xf32>
    %c0_10 = arith.constant 0 : index
    %c0_11 = arith.constant 0 : index
    %12 = vector.load %arg5[%c0_10, %c0_11] : memref<1x2xf32, #tpu.memory_space<vmem>>, vector<1x2xf32>
    %13 = vector.broadcast %12 : vector<1x2xf32> to vector<32x2xf32>
    %14 = arith.addf %11, %13 : vector<32x2xf32>
    %15 = vector.shape_cast %14 : vector<32x2xf32> to vector<2x16x2xf32>
    %16 = tpu.iota {dimensions = array<i32: 1>} : vector<2x16x2xi32>
    %c8_i32 = arith.constant 8 : i32
    %17 = vector.broadcast %c8_i32 : i32 to vector<2x16x2xi32>
    %18 = arith.cmpi slt, %16, %17 : vector<2x16x2xi32>
    %cst_12 = arith.constant -1.000000e+30 : f32
    %19 = vector.broadcast %cst_12 : f32 to vector<2x16x2xf32>
    %20 = arith.select %18, %15, %19 : vector<2x16x2xi1>, vector<2x16x2xf32>
    %cst_13 = arith.constant dense<0xFF800000> : vector<2x2xf32>
    %21 = vector.multi_reduction <maximumf>, %20, %cst_13 [1] : vector<2x16x2xf32> to vector<2x2xf32>
    %22 = vector.shape_cast %21 : vector<2x2xf32> to vector<2x1x2xf32>
    %23 = vector.broadcast %22 : vector<2x1x2xf32> to vector<2x16x2xf32>
    %24 = arith.subf %20, %23 : vector<2x16x2xf32>
    %25 = math.exp %24 : vector<2x16x2xf32>
    %cst_14 = arith.constant dense<0.000000e+00> : vector<2x2xf32>
    %26 = vector.multi_reduction <add>, %25, %cst_14 [1] : vector<2x16x2xf32> to vector<2x2xf32>
    %27 = vector.shape_cast %26 : vector<2x2xf32> to vector<2x1x2xf32>
    %28 = tpu.reciprocal %27 {approx = true} : vector<2x1x2xf32> -> vector<2x1x2xf32>
    %29 = vector.broadcast %28 : vector<2x1x2xf32> to vector<2x16x2xf32>
    %30 = arith.mulf %25, %29 : vector<2x16x2xf32>
    %31 = vector.extract_strided_slice %30 {offsets = [0, 0, 0], sizes = [2, 16, 1], strides = [1, 1, 1]} : vector<2x16x2xf32> to vector<2x16x1xf32>
    %32 = arith.extf %0 : vector<2x16x32xbf16> to vector<2x16x32xf32>
    %33 = vector.broadcast %31 : vector<2x16x1xf32> to vector<2x16x32xf32>
    %34 = arith.mulf %33, %32 : vector<2x16x32xf32>
    %cst_15 = arith.constant dense<0.000000e+00> : vector<2x32xf32>
    %35 = vector.multi_reduction <add>, %34, %cst_15 [1] : vector<2x16x32xf32> to vector<2x32xf32>
    %36 = vector.extract_strided_slice %30 {offsets = [0, 0, 1], sizes = [2, 16, 1], strides = [1, 1, 1]} : vector<2x16x2xf32> to vector<2x16x1xf32>
    %37 = arith.extf %0 : vector<2x16x32xbf16> to vector<2x16x32xf32>
    %38 = vector.broadcast %36 : vector<2x16x1xf32> to vector<2x16x32xf32>
    %39 = arith.mulf %38, %37 : vector<2x16x32xf32>
    %cst_16 = arith.constant dense<0.000000e+00> : vector<2x32xf32>
    %40 = vector.multi_reduction <add>, %39, %cst_16 [1] : vector<2x16x32xf32> to vector<2x32xf32>
    %41 = tpu.concatenate %35, %40 in 1 : vector<2x32xf32>, vector<2x32xf32> -> vector<2x64xf32>
    %c0_17 = arith.constant 0 : index
    %c0_18 = arith.constant 0 : index
    %42 = vector.load %arg6[%c0_17, %c0_18] : memref<2x64xf32, #tpu.memory_space<vmem>>, vector<2x64xf32>
    tpu.vector_store %arg6[%c0_17, %c0_18], %41 {strides = array<i32>} : memref<2x64xf32, #tpu.memory_space<vmem>>, vector<2x64xf32>,
    return
  }
  func.func @transform_0(%arg0: i32) -> (i32, i32, i32) {
    %c0_i32 = arith.constant 0 : i32
    %c0_i32_0 = arith.constant 0 : i32
    %c0_i32_1 = arith.constant 0 : i32
    return %arg0, %c0_i32, %c0_i32_0 : i32, i32, i32
  }
  func.func @transform_1(%arg0: i32) -> (i32, i32) {
    %c0_i32 = arith.constant 0 : i32
    %c0_i32_0 = arith.constant 0 : i32
    %c0_i32_1 = arith.constant 0 : i32
    return %c0_i32, %c0_i32_0 : i32, i32
  }
  func.func @transform_2(%arg0: i32) -> (i32, i32) {
    %c0_i32 = arith.constant 0 : i32
    %c0_i32_0 = arith.constant 0 : i32
    %c0_i32_1 = arith.constant 0 : i32
    return %c0_i32, %c0_i32_0 : i32, i32
  }
  func.func @transform_3(%arg0: i32) -> (i32, i32) {
    %c0_i32 = arith.constant 0 : i32
    %c0_i32_0 = arith.constant 0 : i32
    %c0_i32_1 = arith.constant 0 : i32
    return %c0_i32, %c0_i32_0 : i32, i32
  }
  func.func @transform_4(%arg0: i32) -> (i32, i32) {
    %c0_i32 = arith.constant 0 : i32
    %c0_i32_0 = arith.constant 0 : i32
    %c0_i32_1 = arith.constant 0 : i32
    return %c0_i32, %c0_i32_0 : i32, i32
  }
  func.func @transform_5(%arg0: i32) -> (i32, i32) {
    %c0_i32 = arith.constant 0 : i32
    %c0_i32_0 = arith.constant 0 : i32
    return %arg0, %c0_i32 : i32, i32
  }
}

</mosaic_0001>

<llo_original>
// kernel: tpu_custom_call.1
$region0: #{tpu_custom_call.1}
  #allocation0 [shape = 'u32[]', space=smem, size = 0x4, offset = 0x4, fixed_abs, tag = 'smem constant byte address 0x4 - core index']
  #allocation1 [shape = 'u32[144,128]{1,0:T(1,128)}', space=vmem, size = 0x12000, scoped, tag = 'internal scratch']
  %s0 = inlined_call_operand.vmem [shape: bf16[2,16,32], index: 0, kind: input, shape index: {}]
  %s1 = inlined_call_operand.hbm [shape: bf16[32,32], index: 1, kind: input, shape index: {}]
  %s2 = inlined_call_operand.vmem [shape: f32[1,32], index: 2, kind: input, shape index: {}]
  %s3 = inlined_call_operand.vmem [shape: bf16[32,2], index: 3, kind: input, shape index: {}]
  %s4 = inlined_call_operand.vmem [shape: f32[1,2], index: 4, kind: input, shape index: {}]
  %s5 = inlined_call_operand.hbm [shape: f32[2,64], index: 5, kind: output, shape index: {}]
  %s6 = sld [smem:[#allocation0]]
  $region34: #{tpu_custom_call.1} parent=0
    _
  %s8 = ssub.s32 1, %s6
  %s9 = scalar_select 0, %s8, %s6
  $region1: #{tpu_custom_call.1} parent=0
    #allocation2 [shape = 'u8[8192]{0}', space=vmem, size = 0x2000, scoped, tag = 'input window, operand 1, single buffered']
    #allocation3 [shape = 's32[1]{0}', space=sflag, size = 0x4, scoped, tag = 'scoped memory for tpu_custom_call.1']
    #allocation4 [shape = 's32[1]{0}', space=sflag, size = 0x4, scoped, tag = 'scoped memory for tpu_custom_call.1']
    #allocation5 [shape = 'u8[1024]{0}', space=vmem, size = 0x400, scoped, tag = 'output window, operand 0, single buffered']
    %10 = vsyncpa [#allocation3], 0
    %11 = vsyncpa [#allocation4], 0
    // Predicated region
    $region2: #{tpu_custom_call.1} parent=1 // pred_check
      _
    $region3: #{tpu_custom_call.1} parent=1 // pred_check_branch
      %13 = sbr.rel (0) target = $region5
    $region4: #{tpu_custom_call.1} parent=1 // pred_region
      _
    $region5: #{tpu_custom_call.1} parent=1 // pred_fallthru
      _
    // Predicated region
    $region6: #{tpu_custom_call.1} parent=1 // pred_check
      _
    $region7: #{tpu_custom_call.1} parent=1 // pred_check_branch
      %15 = sbr.rel (0) target = $region9
    $region8: #{tpu_custom_call.1} parent=1 // pred_region
      %s17 = ssub.s32 256, 256
      %18 = vsyncadd [#allocation3], %s17
      %s19 = sshll.u32 [#allocation2], 4
      %s20 = int_to_ptr.vmem [resolvable:$true] %s19
      %25 = dma.hbm_to_vmem [thread:$0]  %s1, 256, %s20, [#allocation3], 64, 64, 4
    $region9: #{tpu_custom_call.1} parent=1 // pred_fallthru
      _
    // Predicated region
    $region10: #{tpu_custom_call.1} parent=1 // pred_check
      _
    $region11: #{tpu_custom_call.1} parent=1 // pred_check_branch
      %27 = sbr.rel (0) target = $region13
    $region12: #{tpu_custom_call.1} parent=1 // pred_region
      _
    $region13: #{tpu_custom_call.1} parent=1 // pred_fallthru
      _
    // Predicated region
    $region14: #{tpu_custom_call.1} parent=1 // pred_check
      _
    $region15: #{tpu_custom_call.1} parent=1 // pred_check_branch
      %29 = sbr.rel (0) target = $region17
    $region16: #{tpu_custom_call.1} parent=1 // pred_region
      _
    $region17: #{tpu_custom_call.1} parent=1 // pred_fallthru
      _
    // Predicated region
    $region18: #{tpu_custom_call.1} parent=1 // pred_check
      _
    $region19: #{tpu_custom_call.1} parent=1 // pred_check_branch
      %31 = sbr.rel (0) target = $region21
    $region20: #{tpu_custom_call.1} parent=1 // pred_region
      _
    $region21: #{tpu_custom_call.1} parent=1 // pred_fallthru
      _
    // Predicated region
    $region22: #{tpu_custom_call.1} parent=1 // pred_check
      _
    $region23: #{tpu_custom_call.1} parent=1 // pred_check_branch
      %33 = sbr.rel (0) target = $region25
    $region24: #{tpu_custom_call.1} parent=1 // pred_region
      %34 = dma.done [#allocation3], 256
    $region25: #{tpu_custom_call.1} parent=1 // pred_fallthru
      _
    %v36 = vld [vmem:[%s0] sm:$0xf]
    %v37 = vld [vmem:[%s0 + $0x4] sm:$0xf]
    %v38 = vld [vmem:[%s0 + $0x8] sm:$0xf]
    %v39 = vld [vmem:[%s0 + $0xc] sm:$0xf]
    %v40 = vld [vmem:[#allocation2] sm:$0xf]
    %v41 = vld [vmem:[#allocation2 + $0x4] sm:$0xf]
    %v42 = vld [vmem:[#allocation2 + $0x8] sm:$0xf]
    %v43 = vld [vmem:[#allocation2 + $0xc] sm:$0xf]
    %v44 = vld [vmem:[%s2] sm:$0x1]
    %v46 = vlaneseq
    %v47 = vshrl.u32 %v46, 7
    %v48 = vsub.s32 0, %v47
    %v49 = vrot.slane %v44, %v48
    %v55 = vunpack.c.l.b16 %v36
    %v56 = vunpack.c.l.b16 %v37
    %v57 = vunpack.c.l.b16 %v38
    %v58 = vunpack.c.l.b16 %v39
    %v59 = vpack.c.b16 %v56, %v55
    %v60 = vpack.c.b16 %v58, %v57
    %v65 = vunpack.c.l.b16 %v40
    %v66 = vunpack.c.l.b16 %v41
    %v67 = vunpack.c.l.b16 %v42
    %v68 = vunpack.c.l.b16 %v43
    %v69 = vpack.c.b16 %v66, %v65
    %v70 = vpack.c.b16 %v68, %v67
    %vm73 = vcmask 261120
    %v75 = vsel %vm73, %v59, 0
    %v78 = vsel %vm73, %v60, 0
    %80 = vmatprep.subr.bf16.mxu0 0
    %81 = vmatpush1.bf16.msra.mxu0 0
    %82 = vmatprep.subr.bf16.mxu0 0
    %83 = vmatpush1.bf16.msra.mxu0 0
    %84 = vmatprep.subr.bf16.mxu0 0
    %85 = vmatpush1.bf16.msra.mxu0 0
    %86 = vmatprep.subr.bf16.mxu0 0
    %87 = vmatpush1.bf16.msra.mxu0 0
    %88 = vmatprep.subr.bf16.mxu0 0
    %89 = vmatpush1.bf16.msra.mxu0 0
    %90 = vmatprep.subr.bf16.mxu0 0
    %91 = vmatpush1.bf16.msra.mxu0 0
    %92 = vmatprep.subr.bf16.mxu0 0
    %93 = vmatpush1.bf16.msra.mxu0 %v70
    %94 = vmatprep.subr.bf16.mxu0 0
    %95 = vmatpush1.bf16.msra.mxu0 %v69
    %96 = vmatprep.subr.bf16.mxu0 0
    %97 = vmatpush2.bf16.msra.mxu0 0
    %98 = vmatprep.subr.bf16.mxu0 0
    %99 = vmatpush2.bf16.msra.mxu0 0
    %100 = vmatprep.subr.bf16.mxu0 0
    %101 = vmatpush2.bf16.msra.mxu0 0
    %102 = vmatprep.subr.bf16.mxu0 0
    %103 = vmatpush2.bf16.msra.mxu0 0
    %104 = vmatprep.subr.bf16.mxu0 0
    %105 = vmatpush2.bf16.msra.mxu0 0
    %106 = vmatprep.subr.bf16.mxu0 0
    %107 = vmatpush2.bf16.msra.mxu0 0
    %108 = vmatprep.subr.bf16.mxu0 0
    %109 = vmatpush2.bf16.msra.mxu0 0
    %110 = vmatprep.subr.bf16.mxu0 0
    %111 = vmatpush2.bf16.msra.mxu0 0
    %112 = vmatprep.mubr.bf16.mxu0 0
    %113 = vmatmul.mubr.bf16.gmra.mxu0 %v75
    %v114 = vpop.f32.mrf.mxu0
    %v115 = vadd.f32 %v49, %v114
    %v116 = vpop.f32.mrf.mxu0
    %v117 = vpop.f32.mrf.mxu0
    %v118 = vadd.f32 %v49, %v117
    %v119 = vpop.f32.mrf.mxu0
    %120 = vmatprep.mubr.bf16.mxu0 0
    %121 = vmatmul.mubr.bf16.gmra.mxu0 %v78
    %v122 = vpop.f32.mrf.mxu0
    %v123 = vadd.f32 %v49, %v122
    %v124 = vpop.f32.mrf.mxu0
    %v125 = vpop.f32.mrf.mxu0
    %v126 = vadd.f32 %v49, %v125
    %v127 = vpop.f32.mrf.mxu0
    %128 = vdwg.mxu0
    %v129 = vmax.f32 %v115, 0.0
    %v130 = vmax.f32 %v118, 0.0
    %v131 = vmax.f32 %v123, 0.0
    %v132 = vmax.f32 %v126, 0.0
    %v133 = vpack.c.bf16 %v130, %v129
    %v134 = vpack.c.bf16 %v132, %v131
    %v135 = vld [vmem:[%s3] sm:$0xf]
    %v136 = vld [vmem:[%s3 + $0x4] sm:$0xf]
    %v137 = vld [vmem:[%s3 + $0x8] sm:$0xf]
    %v138 = vld [vmem:[%s3 + $0xc] sm:$0xf]
    %v139 = vld [vmem:[%s4] sm:$0x1]
    %v141 = vlaneseq
    %v142 = vshrl.u32 %v141, 7
    %v143 = vsub.s32 0, %v142
    %v144 = vrot.slane %v139, %v143
    %v150 = vunpack.c.l.b16 %v135
    %v151 = vunpack.c.l.b16 %v136
    %v152 = vunpack.c.l.b16 %v137
    %v153 = vunpack.c.l.b16 %v138
    %v154 = vpack.c.b16 %v151, %v150
    %v155 = vpack.c.b16 %v153, %v152
    %v159 = vsel %vm73, %v133, 0
    %v162 = vsel %vm73, %v134, 0
    %164 = vmatprep.subr.bf16.mxu0 0
    %165 = vmatpush1.bf16.msra.mxu0 0
    %166 = vmatprep.subr.bf16.mxu0 0
    %167 = vmatpush1.bf16.msra.mxu0 0
    %168 = vmatprep.subr.bf16.mxu0 0
    %169 = vmatpush1.bf16.msra.mxu0 0
    %170 = vmatprep.subr.bf16.mxu0 0
    %171 = vmatpush1.bf16.msra.mxu0 0
    %172 = vmatprep.subr.bf16.mxu0 0
    %173 = vmatpush1.bf16.msra.mxu0 0
    %174 = vmatprep.subr.bf16.mxu0 0
    %175 = vmatpush1.bf16.msra.mxu0 0
    %176 = vmatprep.subr.bf16.mxu0 0
    %177 = vmatpush1.bf16.msra.mxu0 %v155
    %178 = vmatprep.subr.bf16.mxu0 0
    %179 = vmatpush1.bf16.msra.mxu0 %v154
    %180 = vmatprep.subr.bf16.mxu0 0
    %181 = vmatpush2.bf16.msra.mxu0 0
    %182 = vmatprep.subr.bf16.mxu0 0
    %183 = vmatpush2.bf16.msra.mxu0 0
    %184 = vmatprep.subr.bf16.mxu0 0
    %185 = vmatpush2.bf16.msra.mxu0 0
    %186 = vmatprep.subr.bf16.mxu0 0
    %187 = vmatpush2.bf16.msra.mxu0 0
    %188 = vmatprep.subr.bf16.mxu0 0
    %189 = vmatpush2.bf16.msra.mxu0 0
    %190 = vmatprep.subr.bf16.mxu0 0
    %191 = vmatpush2.bf16.msra.mxu0 0
    %192 = vmatprep.subr.bf16.mxu0 0
    %193 = vmatpush2.bf16.msra.mxu0 0
    %194 = vmatprep.subr.bf16.mxu0 0
    %195 = vmatpush2.bf16.msra.mxu0 0
    %196 = vmatprep.mubr.bf16.mxu0 0
    %197 = vmatmul.mubr.bf16.gmra.mxu0 %v159
    %v198 = vpop.f32.mrf.mxu0
    %v199 = vadd.f32 %v144, %v198
    %v200 = vpop.f32.mrf.mxu0
    %v201 = vpop.f32.mrf.mxu0
    %v202 = vadd.f32 %v144, %v201
    %v203 = vpop.f32.mrf.mxu0
    %204 = vmatprep.mubr.bf16.mxu0 0
    %205 = vmatmul.mubr.bf16.gmra.mxu0 %v162
    %v206 = vpop.f32.mrf.mxu0
    %v207 = vadd.f32 %v144, %v206
    %v208 = vpop.f32.mrf.mxu0
    %v209 = vpop.f32.mrf.mxu0
    %v210 = vadd.f32 %v144, %v209
    %v211 = vpop.f32.mrf.mxu0
    %212 = vdwg.mxu0
    %v213 = vlaneseq
    %v214 = vshrl.u32 %v213, 7
    %v215 = vadd.s32 %v214, 8
    %vm216 = vcmp.lt.s32.totalorder %v214, 8
    %vm217 = vcmp.lt.s32.totalorder %v215, 8
    %v218 = vsel %vm216, %v199, -1e+30
    %v219 = vsel %vm217, %v202, -1e+30
    %v220 = vsel %vm216, %v207, -1e+30
    %v221 = vsel %vm217, %v210, -1e+30
    %vm222 = vcmask 15360
    %v223 = vsel %vm222, %v218, -inf
    %v224 = vsel %vm222, %v219, -inf
    %v225 = vmax.f32 %v223, %v224
    %v226 = vrot.slane %v225, 4
    %v227 = vmax.f32 %v225, %v226
    %v228 = vrot.slane %v227, 2
    %v229 = vmax.f32 %v227, %v228
    %v230 = vrot.slane %v229, 1
    %v231 = vmax.f32 %v229, %v230
    %v232 = vsel %vm222, %v220, -inf
    %v233 = vsel %vm222, %v221, -inf
    %v234 = vmax.f32 %v232, %v233
    %v235 = vrot.slane %v234, 4
    %v236 = vmax.f32 %v234, %v235
    %v237 = vrot.slane %v236, 2
    %v238 = vmax.f32 %v236, %v237
    %v239 = vrot.slane %v238, 1
    %v240 = vmax.f32 %v238, %v239
    %v241 = vsub.f32 %v218, %v231
    %v242 = vsub.f32 %v219, %v231
    %v243 = vsub.f32 %v220, %v240
    %v244 = vsub.f32 %v221, %v240
    %v245 = vmul.f32 %v241, 1.442695
    %v246 = vpow.pop %v245
    %v247 = vmul.f32 %v242, 1.442695
    %v248 = vpow.pop %v247
    %v249 = vmul.f32 %v243, 1.442695
    %v250 = vpow.pop %v249
    %v251 = vmul.f32 %v244, 1.442695
    %v252 = vpow.pop %v251
    %v253 = vsel %vm222, %v246, 0.0
    %v254 = vsel %vm222, %v248, 0.0
    %v255 = vadd.f32 %v253, %v254
    %v256 = vrot.slane %v255, 4
    %v257 = vadd.f32 %v255, %v256
    %v258 = vrot.slane %v257, 2
    %v259 = vadd.f32 %v257, %v258
    %v260 = vrot.slane %v259, 1
    %v261 = vadd.f32 %v259, %v260
    %v262 = vsel %vm222, %v250, 0.0
    %v263 = vsel %vm222, %v252, 0.0
    %v264 = vadd.f32 %v262, %v263
    %v265 = vrot.slane %v264, 4
    %v266 = vadd.f32 %v264, %v265
    %v267 = vrot.slane %v266, 2
    %v268 = vadd.f32 %v266, %v267
    %v269 = vrot.slane %v268, 1
    %v270 = vadd.f32 %v268, %v269
    %v271 = vrcp.pop %v261
    %v272 = vrcp.pop %v270
    %v273 = vmul.f32 %v246, %v271
    %v274 = vmul.f32 %v248, %v271
    %v275 = vmul.f32 %v250, %v272
    %v276 = vmul.f32 %v252, %v272
    %v277 = vunpack.c.l.bf16 %v36
    %v278 = vunpack.c.l.bf16 %v37
    %v279 = vunpack.c.l.bf16 %v38
    %v280 = vunpack.c.l.bf16 %v39
    %282 = vset.pattern.permute.xlu0 0
    %283 = vperm.xlu0 %282, %v273
    %v284 = vpop.permute.xlu0 %283
    %287 = vset.pattern.permute.xlu0 0
    %288 = vperm.xlu0 %287, %v274
    %v289 = vpop.permute.xlu0 %288
    %292 = vset.pattern.permute.xlu0 0
    %293 = vperm.xlu0 %292, %v275
    %v294 = vpop.permute.xlu0 %293
    %297 = vset.pattern.permute.xlu0 0
    %298 = vperm.xlu0 %297, %v276
    %v299 = vpop.permute.xlu0 %298
    %v301 = vmul.f32 %v284, %v277
    %v302 = vmul.f32 %v289, %v278
    %v303 = vmul.f32 %v294, %v279
    %v304 = vmul.f32 %v299, %v280
    %v305 = vsel %vm73, %v301, 0.0
    %v306 = vsel %vm73, %v302, 0.0
    %v307 = vadd.f32 %v305, %v306
    %v308 = vrot.slane %v307, 4
    %v309 = vadd.f32 %v307, %v308
    %v310 = vrot.slane %v309, 2
    %v311 = vadd.f32 %v309, %v310
    %v312 = vrot.slane %v311, 1
    %v313 = vadd.f32 %v311, %v312
    %v314 = vsel %vm73, %v303, 0.0
    %v315 = vsel %vm73, %v304, 0.0
    %v316 = vadd.f32 %v314, %v315
    %v317 = vrot.slane %v316, 4
    %v318 = vadd.f32 %v316, %v317
    %v319 = vrot.slane %v318, 2
    %v320 = vadd.f32 %v318, %v319
    %v321 = vrot.slane %v320, 1
    %v322 = vadd.f32 %v320, %v321
    %323 = vset.pattern.permute.xlu0 1
    %324 = vperm.xlu0 %323, %v273
    %v325 = vpop.permute.xlu0 %324
    %327 = vset.pattern.permute.xlu0 1
    %328 = vperm.xlu0 %327, %v274
    %v329 = vpop.permute.xlu0 %328
    %331 = vset.pattern.permute.xlu0 1
    %332 = vperm.xlu0 %331, %v275
    %v333 = vpop.permute.xlu0 %332
    %335 = vset.pattern.permute.xlu0 1
    %336 = vperm.xlu0 %335, %v276
    %v337 = vpop.permute.xlu0 %336
    %v339 = vmul.f32 %v325, %v277
    %v340 = vmul.f32 %v329, %v278
    %v341 = vmul.f32 %v333, %v279
    %v342 = vmul.f32 %v337, %v280
    %v343 = vsel %vm73, %v339, 0.0
    %v344 = vsel %vm73, %v340, 0.0
    %v345 = vadd.f32 %v343, %v344
    %v346 = vrot.slane %v345, 4
    %v347 = vadd.f32 %v345, %v346
    %v348 = vrot.slane %v347, 2
    %v349 = vadd.f32 %v347, %v348
    %v350 = vrot.slane %v349, 1
    %v351 = vadd.f32 %v349, %v350
    %v352 = vsel %vm73, %v341, 0.0
    %v353 = vsel %vm73, %v342, 0.0
    %v354 = vadd.f32 %v352, %v353
    %v355 = vrot.slane %v354, 4
    %v356 = vadd.f32 %v354, %v355
    %v357 = vrot.slane %v356, 2
    %v358 = vadd.f32 %v356, %v357
    %v359 = vrot.slane %v358, 1
    %v360 = vadd.f32 %v358, %v359
    %vm363 = vcmask 1041409
    %v364 = vsel %vm363, %v322, %v313
    %v368 = vsel %vm363, %v360, %v351
    %369 = vrot.lane.b32.xlu0 %v368, 32
    %v370 = vpop.permute.xlu0 %369
    %v372 = vsel %vm73, %v364, %v370
    %vm373 = vcmask 517120
    %374 = vst.msk [vmem:[#allocation5] sm:$0x3] %vm373, %v372
    // Predicated region
    $region26: #{tpu_custom_call.1} parent=1 // pred_check
      _
    $region27: #{tpu_custom_call.1} parent=1 // pred_check_branch
      %376 = sbr.rel (0) target = $region29
    $region28: #{tpu_custom_call.1} parent=1 // pred_region
      %s378 = ssub.s32 32, 32
      %379 = vsyncadd [#allocation4], %s378
      %s381 = sshll.u32 [#allocation5], 4
      %s382 = int_to_ptr.vmem [resolvable:$true] %s381
      %384 = dma.vmem_to_hbm [thread:$0]  %s382, 32, %s5, [#allocation4]
    $region29: #{tpu_custom_call.1} parent=1 // pred_fallthru
      _
    // Predicated region
    $region30: #{tpu_custom_call.1} parent=1 // pred_check
      _
    $region31: #{tpu_custom_call.1} parent=1 // pred_check_branch
      %386 = sbr.rel (0) target = $region33
    $region32: #{tpu_custom_call.1} parent=1 // pred_region
      %387 = dma.done [#allocation4], 32
    $region33: #{tpu_custom_call.1} parent=1 // pred_fallthru
      _
    %388 = vsyncpa [#allocation3], 1
    %389 = vsyncpa [#allocation4], 1

</llo_original>
